<compile_context>
chip_gen: v5e
topology: v5e:2x2
jax: 0.10.0
libtpu: 0.0.40
codegen_flags: <defaults>
</compile_context>

<pallas_src>
import math

import jax
import jax.numpy as jnp
from jax.experimental import pallas as pl
from jax.experimental.pallas import tpu as pltpu

# ---- model dims (small, consistent with the module's structure) ----
B = 2            # batch
S = 8            # seq_len
D = 32           # d_model
H = 4            # n_heads
DH = D // H      # d_head
DFF = 64         # d_ff
N = B * S        # flattened rows
SCALE = math.sqrt(DH)
LN_EPS = 1e-5    # nn.LayerNorm default


def _layer_norm(y, gamma, beta):
    mu = jnp.mean(y, axis=-1, keepdims=True)
    var = jnp.mean((y - mu) ** 2, axis=-1, keepdims=True)
    return (y - mu) * jax.lax.rsqrt(var + LN_EPS) * gamma + beta


def encoder_layer_kernel(x_ref, w_attn_ref, w_ffg_ref, w2_ref, b96_ref, vec_ref, o_ref):
    # x_ref: (N, D) f32, N = B*S
    x = x_ref[...]                                   # (16, 32) f32
    xb = x.astype(jnp.bfloat16)

    w_attn = w_attn_ref[...]                         # (32, 128) bf16 = [Wq|Wk|Wv|Wo]
    w_qkv = w_attn[:, : 3 * D]                       # (32, 96) bf16
    b_qkv = b96_ref[0:1, :]                          # (1, 96) f32 = [bq|bk|bv]
    bo = vec_ref[0:1, :]                             # (1, 32) f32

    # ---- fused Q/K/V projection: one (16,32)x(32,96) MXU pass ----
    qkv = jnp.dot(xb, w_qkv, preferred_element_type=jnp.float32) + b_qkv   # (16, 96)
    q = qkv[:, 0 * D:1 * D].astype(jnp.bfloat16).reshape(B, S, D)
    k = qkv[:, 1 * D:2 * D].astype(jnp.bfloat16).reshape(B, S, D)
    v = qkv[:, 2 * D:3 * D].astype(jnp.bfloat16).reshape(B, S, D)

    # ---- multi-head attention, batched over B; output projection folded in ----
    attn_proj = jnp.zeros((N, D), jnp.float32)
    for h in range(H):
        sl = slice(h * DH, (h + 1) * DH)
        qh, kh, vh = q[:, :, sl], k[:, :, sl], v[:, :, sl]        # (B, S, DH) bf16
        sc = jnp.einsum('bqd,bkd->bqk', qh, kh,
                        preferred_element_type=jnp.float32) * (1.0 / SCALE)
        sc = sc - jnp.max(sc, axis=-1, keepdims=True)
        p = jnp.exp(sc)
        p = p / jnp.sum(p, axis=-1, keepdims=True)                # softmax (f32)
        oh = jnp.einsum('bqk,bkd->bqd', p.astype(jnp.bfloat16), vh,
                        preferred_element_type=jnp.float32)       # (B, S, DH) f32
        wo_h = w_attn[h * DH:(h + 1) * DH, 3 * D:4 * D]           # (DH, D) bf16
        attn_proj = attn_proj + jnp.dot(
            oh.reshape(N, DH).astype(jnp.bfloat16), wo_h,
            preferred_element_type=jnp.float32)
    attn_proj = attn_proj + bo

    # ---- residual + LayerNorm 1 ----
    g1, beta1 = vec_ref[2:3, :], vec_ref[3:4, :]
    x1 = _layer_norm(x + attn_proj, g1, beta1)                    # (16, 32) f32

    # ---- fused FFN-up + chemical gate: one (16,32)x(32,96) MXU pass ----
    x1b = x1.astype(jnp.bfloat16)
    b_1g = b96_ref[1:2, :]                                        # (1, 96) = [b1|bg]
    h_cat = jnp.dot(x1b, w_ffg_ref[...], preferred_element_type=jnp.float32) + b_1g
    h1 = jax.nn.gelu(h_cat[:, :DFF], approximate=True)            # (16, 64) f32
    gate = jax.nn.sigmoid(h_cat[:, DFF:DFF + D])                  # (16, 32) f32

    b2 = vec_ref[1:2, :]
    ff = jnp.dot(h1.astype(jnp.bfloat16), w2_ref[...],
                 preferred_element_type=jnp.float32) + b2
    ff_out = gate * ff + (1.0 - gate) * x1

    # ---- residual + LayerNorm 2 ----
    g2, beta2 = vec_ref[4:5, :], vec_ref[5:6, :]
    o_ref[...] = _layer_norm(x1 + ff_out, g2, beta2).astype(o_ref.dtype)


@jax.jit
def encoder_layer(x, packed):
    w_attn, w_ffg, w2, b96, vecs = packed
    xf = x.reshape(N, D)
    vmem = pl.BlockSpec(memory_space=pltpu.MemorySpace.VMEM)
    out = pl.pallas_call(
        encoder_layer_kernel,
        out_shape=jax.ShapeDtypeStruct((N, D), jnp.float32),
        in_specs=[vmem, vmem, vmem, vmem, vmem, vmem],
        out_specs=vmem,
    )(xf, w_attn, w_ffg, w2, b96, vecs)
    return out.reshape(B, S, D)


# ---------------- parameter construction / packing ----------------
def make_params(key):
    ks = jax.random.split(key, 16)
    scale = 0.1

    def lin(kw, kb, din, dout):
        w = scale * jax.random.normal(kw, (din, dout), jnp.float32)  # pre-transposed
        b = scale * jax.random.normal(kb, (1, dout), jnp.float32)
        return w, b

    wq, bq = lin(ks[0], ks[1], D, D)
    wk, bk = lin(ks[2], ks[3], D, D)
    wv, bv = lin(ks[4], ks[5], D, D)
    wo, bo = lin(ks[6], ks[7], D, D)
    w1, b1 = lin(ks[8], ks[9], D, DFF)
    w2, b2 = lin(ks[10], ks[11], DFF, D)
    wg, bg = lin(ks[12], ks[13], D, D)
    g1 = jnp.ones((1, D), jnp.float32)
    beta1 = jnp.zeros((1, D), jnp.float32)
    g2 = jnp.ones((1, D), jnp.float32)
    beta2 = jnp.zeros((1, D), jnp.float32)
    return (wq, bq, wk, bk, wv, bv, wo, bo,
            w1, b1, w2, b2, wg, bg, g1, beta1, g2, beta2)


def pack_params(params):
    (wq, bq, wk, bk, wv, bv, wo, bo,
     w1, b1, w2, b2, wg, bg, g1, beta1, g2, beta2) = params
    w_attn = jnp.concatenate([wq, wk, wv, wo], axis=1).astype(jnp.bfloat16)   # (32, 128)
    w_ffg = jnp.concatenate([w1, wg], axis=1).astype(jnp.bfloat16)            # (32, 96)
    w2b = w2.astype(jnp.bfloat16)                                             # (64, 32)
    b96 = jnp.concatenate(
        [jnp.concatenate([bq, bk, bv], axis=1),
         jnp.concatenate([b1, bg], axis=1)], axis=0)                          # (2, 96) f32
    vecs = jnp.concatenate([bo, b2, g1, beta1, g2, beta2], axis=0)            # (6, 32) f32
    return (w_attn, w_ffg, w2b, b96, vecs)


# ---------------- pure-JAX reference (mirrors kernel numerics) ----------------
def reference(x, params):
    (wq, bq, wk, bk, wv, bv, wo, bo,
     w1, b1, w2, b2, wg, bg, g1, beta1, g2, beta2) = params
    bf = jnp.bfloat16

    def mm(a, w):
        return jnp.dot(a.astype(bf), w.astype(bf), preferred_element_type=jnp.float32)

    def per_batch(xb):
        q = mm(xb, wq) + bq
        k = mm(xb, wk) + bk
        v = mm(xb, wv) + bv
        outs = []
        for h in range(H):
            sl = slice(h * DH, (h + 1) * DH)
            qh, kh, vh = (q[:, sl].astype(bf), k[:, sl].astype(bf), v[:, sl].astype(bf))
            s = jnp.dot(qh, kh.T, preferred_element_type=jnp.float32) * (1.0 / SCALE)
            s = s - jnp.max(s, axis=-1, keepdims=True)
            p = jnp.exp(s)
            p = p / jnp.sum(p, axis=-1, keepdims=True)
            outs.append(jnp.dot(p.astype(bf), vh, preferred_element_type=jnp.float32))
        attn = mm(jnp.concatenate(outs, axis=-1), wo) + bo
        x1 = _layer_norm(xb + attn, g1, beta1)
        h1 = jax.nn.gelu(mm(x1, w1) + b1, approximate=True)
        ff = mm(h1, w2) + b2
        gate = jax.nn.sigmoid(mm(x1, wg) + bg)
        ff_out = gate * ff + (1.0 - gate) * x1
        return _layer_norm(x1 + ff_out, g2, beta2)

    return jax.vmap(per_batch)(x)


if __name__ == "__main__":
    key = jax.random.PRNGKey(0)
    kx, kp = jax.random.split(key)
    x = jax.random.normal(kx, (B, S, D), jnp.float32)
    params = make_params(kp)
    packed = pack_params(params)

    out = jax.block_until_ready(encoder_layer(x, packed))
    ref = jax.block_until_ready(reference(x, params))

    assert out.shape == (B, S, D)
    err = jnp.max(jnp.abs(out - ref))
    assert jnp.allclose(out, ref, atol=1e-3, rtol=1e-3), f"max abs err {err}"
    print("KERNEL_OK")
</pallas_src>

<mosaic_0001>
module attributes {stable_mosaic.version = 11 : i64} {
  func.func @encoder_layer_kernel(%arg0: memref<16x32xf32, #tpu.memory_space<vmem>>, %arg1: memref<32x128xbf16, #tpu.memory_space<vmem>>, %arg2: memref<32x96xbf16, #tpu.memory_space<vmem>>, %arg3: memref<64x32xbf16, #tpu.memory_space<vmem>>, %arg4: memref<2x96xf32, #tpu.memory_space<vmem>>, %arg5: memref<6x32xf32, #tpu.memory_space<vmem>>, %arg6: memref<16x32xf32, #tpu.memory_space<vmem>>) attributes {dimension_semantics = [], scalar_prefetch = 0 : i64, scratch_operands = 0 : i64, tpu.core_type = #tpu.core_type<tc>} {
    %c0 = arith.constant 0 : index
    %c0_0 = arith.constant 0 : index
    %0 = vector.load %arg0[%c0, %c0_0] : memref<16x32xf32, #tpu.memory_space<vmem>>, vector<16x32xf32>
    %1 = arith.truncf %0 : vector<16x32xf32> to vector<16x32xbf16>
    %c0_1 = arith.constant 0 : index
    %c0_2 = arith.constant 0 : index
    %2 = vector.load %arg1[%c0_1, %c0_2] : memref<32x128xbf16, #tpu.memory_space<vmem>>, vector<32x128xbf16>
    %3 = vector.extract_strided_slice %2 {offsets = [0, 0], sizes = [32, 96], strides = [1, 1]} : vector<32x128xbf16> to vector<32x96xbf16>
    %c0_3 = arith.constant 0 : index
    %c0_4 = arith.constant 0 : index
    %4 = vector.load %arg4[%c0_3, %c0_4] : memref<2x96xf32, #tpu.memory_space<vmem>>, vector<1x96xf32>
    %c0_5 = arith.constant 0 : index
    %c0_6 = arith.constant 0 : index
    %5 = vector.load %arg5[%c0_5, %c0_6] : memref<6x32xf32, #tpu.memory_space<vmem>>, vector<1x32xf32>
    %cst = arith.constant dense<0.000000e+00> : vector<16x96xf32>
    %6 = tpu.matmul %1, %3, %cst {dimension_numbers = #tpu.dot_dimension_numbers<[1], [0], [0], [1], [0, 0, 1, 1], [], []>} : vector<16x32xbf16>, vector<32x96xbf16>, vector<16x96xf32> -> vector<16x96xf32>
    %7 = vector.broadcast %4 : vector<1x96xf32> to vector<16x96xf32>
    %8 = arith.addf %6, %7 : vector<16x96xf32>
    %9 = vector.extract_strided_slice %8 {offsets = [0, 0], sizes = [16, 32], strides = [1, 1]} : vector<16x96xf32> to vector<16x32xf32>
    %10 = arith.truncf %9 : vector<16x32xf32> to vector<16x32xbf16>
    %11 = vector.shape_cast %10 : vector<16x32xbf16> to vector<2x8x32xbf16>
    %12 = vector.extract_strided_slice %8 {offsets = [0, 32], sizes = [16, 32], strides = [1, 1]} : vector<16x96xf32> to vector<16x32xf32>
    %13 = arith.truncf %12 : vector<16x32xf32> to vector<16x32xbf16>
    %14 = vector.shape_cast %13 : vector<16x32xbf16> to vector<2x8x32xbf16>
    %15 = vector.extract_strided_slice %8 {offsets = [0, 64], sizes = [16, 32], strides = [1, 1]} : vector<16x96xf32> to vector<16x32xf32>
    %16 = arith.truncf %15 : vector<16x32xf32> to vector<16x32xbf16>
    %17 = vector.shape_cast %16 : vector<16x32xbf16> to vector<2x8x32xbf16>
    %cst_7 = arith.constant 0.000000e+00 : f32
    %18 = vector.broadcast %cst_7 : f32 to vector<16x32xf32>
    %19 = vector.extract_strided_slice %11 {offsets = [0, 0, 0], sizes = [2, 8, 8], strides = [1, 1, 1]} : vector<2x8x32xbf16> to vector<2x8x8xbf16>
    %20 = vector.extract_strided_slice %14 {offsets = [0, 0, 0], sizes = [2, 8, 8], strides = [1, 1, 1]} : vector<2x8x32xbf16> to vector<2x8x8xbf16>
    %21 = vector.extract_strided_slice %17 {offsets = [0, 0, 0], sizes = [2, 8, 8], strides = [1, 1, 1]} : vector<2x8x32xbf16> to vector<2x8x8xbf16>
    "tpu.trace_start"() <{level = 10 : i32, message = "bqd,bkd->bqk"}> : () -> ()
    %cst_8 = arith.constant dense<0.000000e+00> : vector<2x8x8xf32>
    %22 = tpu.matmul %19, %20, %cst_8 {dimension_numbers = #tpu.dot_dimension_numbers<[2], [2], [1], [1], [0, 0, 0, 1, 1, 1], [0], [0]>} : vector<2x8x8xbf16>, vector<2x8x8xbf16>, vector<2x8x8xf32> -> vector<2x8x8xf32>
    "tpu.trace_stop"() : () -> ()
    %cst_9 = arith.constant 0.353553385 : f32
    %23 = vector.broadcast %cst_9 : f32 to vector<2x8x8xf32>
    %24 = arith.mulf %22, %23 : vector<2x8x8xf32>
    %cst_10 = arith.constant dense<0xFF800000> : vector<2x8xf32>
    %25 = vector.multi_reduction <maximumf>, %24, %cst_10 [2] : vector<2x8x8xf32> to vector<2x8xf32>
    %26 = vector.shape_cast %25 : vector<2x8xf32> to vector<2x8x1xf32>
    %27 = vector.broadcast %26 : vector<2x8x1xf32> to vector<2x8x8xf32>
    %28 = arith.subf %24, %27 : vector<2x8x8xf32>
    %29 = math.exp %28 : vector<2x8x8xf32>
    %cst_11 = arith.constant dense<0.000000e+00> : vector<2x8xf32>
    %30 = vector.multi_reduction <add>, %29, %cst_11 [2] : vector<2x8x8xf32> to vector<2x8xf32>
    %31 = vector.shape_cast %30 : vector<2x8xf32> to vector<2x8x1xf32>
    %32 = vector.broadcast %31 : vector<2x8x1xf32> to vector<2x8x8xf32>
    %33 = arith.divf %29, %32 : vector<2x8x8xf32>
    %34 = arith.truncf %33 : vector<2x8x8xf32> to vector<2x8x8xbf16>
    "tpu.trace_start"() <{level = 10 : i32, message = "bqk,bkd->bqd"}> : () -> ()
    %cst_12 = arith.constant dense<0.000000e+00> : vector<2x8x8xf32>
    %35 = tpu.matmul %34, %21, %cst_12 {dimension_numbers = #tpu.dot_dimension_numbers<[2], [1], [1], [2], [0, 0, 0, 1, 1, 2], [0], [0]>} : vector<2x8x8xbf16>, vector<2x8x8xbf16>, vector<2x8x8xf32> -> vector<2x8x8xf32>
    "tpu.trace_stop"() : () -> ()
    %36 = vector.extract_strided_slice %2 {offsets = [0, 96], sizes = [8, 32], strides = [1, 1]} : vector<32x128xbf16> to vector<8x32xbf16>
    %37 = vector.shape_cast %35 : vector<2x8x8xf32> to vector<16x8xf32>
    %38 = arith.truncf %37 : vector<16x8xf32> to vector<16x8xbf16>
    %cst_13 = arith.constant dense<0.000000e+00> : vector<16x32xf32>
    %39 = tpu.matmul %38, %36, %cst_13 {dimension_numbers = #tpu.dot_dimension_numbers<[1], [0], [0], [1], [0, 0, 1, 1], [], []>} : vector<16x8xbf16>, vector<8x32xbf16>, vector<16x32xf32> -> vector<16x32xf32>
    %40 = arith.addf %18, %39 : vector<16x32xf32>
    %41 = vector.extract_strided_slice %11 {offsets = [0, 0, 8], sizes = [2, 8, 8], strides = [1, 1, 1]} : vector<2x8x32xbf16> to vector<2x8x8xbf16>
    %42 = vector.extract_strided_slice %14 {offsets = [0, 0, 8], sizes = [2, 8, 8], strides = [1, 1, 1]} : vector<2x8x32xbf16> to vector<2x8x8xbf16>
    %43 = vector.extract_strided_slice %17 {offsets = [0, 0, 8], sizes = [2, 8, 8], strides = [1, 1, 1]} : vector<2x8x32xbf16> to vector<2x8x8xbf16>
    "tpu.trace_start"() <{level = 10 : i32, message = "bqd,bkd->bqk"}> : () -> ()
    %cst_14 = arith.constant dense<0.000000e+00> : vector<2x8x8xf32>
    %44 = tpu.matmul %41, %42, %cst_14 {dimension_numbers = #tpu.dot_dimension_numbers<[2], [2], [1], [1], [0, 0, 0, 1, 1, 1], [0], [0]>} : vector<2x8x8xbf16>, vector<2x8x8xbf16>, vector<2x8x8xf32> -> vector<2x8x8xf32>
    "tpu.trace_stop"() : () -> ()
    %cst_15 = arith.constant 0.353553385 : f32
    %45 = vector.broadcast %cst_15 : f32 to vector<2x8x8xf32>
    %46 = arith.mulf %44, %45 : vector<2x8x8xf32>
    %cst_16 = arith.constant dense<0xFF800000> : vector<2x8xf32>
    %47 = vector.multi_reduction <maximumf>, %46, %cst_16 [2] : vector<2x8x8xf32> to vector<2x8xf32>
    %48 = vector.shape_cast %47 : vector<2x8xf32> to vector<2x8x1xf32>
    %49 = vector.broadcast %48 : vector<2x8x1xf32> to vector<2x8x8xf32>
    %50 = arith.subf %46, %49 : vector<2x8x8xf32>
    %51 = math.exp %50 : vector<2x8x8xf32>
    %cst_17 = arith.constant dense<0.000000e+00> : vector<2x8xf32>
    %52 = vector.multi_reduction <add>, %51, %cst_17 [2] : vector<2x8x8xf32> to vector<2x8xf32>
    %53 = vector.shape_cast %52 : vector<2x8xf32> to vector<2x8x1xf32>
    %54 = vector.broadcast %53 : vector<2x8x1xf32> to vector<2x8x8xf32>
    %55 = arith.divf %51, %54 : vector<2x8x8xf32>
    %56 = arith.truncf %55 : vector<2x8x8xf32> to vector<2x8x8xbf16>
    "tpu.trace_start"() <{level = 10 : i32, message = "bqk,bkd->bqd"}> : () -> ()
    %cst_18 = arith.constant dense<0.000000e+00> : vector<2x8x8xf32>
    %57 = tpu.matmul %56, %43, %cst_18 {dimension_numbers = #tpu.dot_dimension_numbers<[2], [1], [1], [2], [0, 0, 0, 1, 1, 2], [0], [0]>} : vector<2x8x8xbf16>, vector<2x8x8xbf16>, vector<2x8x8xf32> -> vector<2x8x8xf32>
    "tpu.trace_stop"() : () -> ()
    %58 = vector.extract_strided_slice %2 {offsets = [8, 96], sizes = [8, 32], strides = [1, 1]} : vector<32x128xbf16> to vector<8x32xbf16>
    %59 = vector.shape_cast %57 : vector<2x8x8xf32> to vector<16x8xf32>
    %60 = arith.truncf %59 : vector<16x8xf32> to vector<16x8xbf16>
    %cst_19 = arith.constant dense<0.000000e+00> : vector<16x32xf32>
    %61 = tpu.matmul %60, %58, %cst_19 {dimension_numbers = #tpu.dot_dimension_numbers<[1], [0], [0], [1], [0, 0, 1, 1], [], []>} : vector<16x8xbf16>, vector<8x32xbf16>, vector<16x32xf32> -> vector<16x32xf32>
    %62 = arith.addf %40, %61 : vector<16x32xf32>
    %63 = vector.extract_strided_slice %11 {offsets = [0, 0, 16], sizes = [2, 8, 8], strides = [1, 1, 1]} : vector<2x8x32xbf16> to vector<2x8x8xbf16>
    %64 = vector.extract_strided_slice %14 {offsets = [0, 0, 16], sizes = [2, 8, 8], strides = [1, 1, 1]} : vector<2x8x32xbf16> to vector<2x8x8xbf16>
    %65 = vector.extract_strided_slice %17 {offsets = [0, 0, 16], sizes = [2, 8, 8], strides = [1, 1, 1]} : vector<2x8x32xbf16> to vector<2x8x8xbf16>
    "tpu.trace_start"() <{level = 10 : i32, message = "bqd,bkd->bqk"}> : () -> ()
    %cst_20 = arith.constant dense<0.000000e+00> : vector<2x8x8xf32>
    %66 = tpu.matmul %63, %64, %cst_20 {dimension_numbers = #tpu.dot_dimension_numbers<[2], [2], [1], [1], [0, 0, 0, 1, 1, 1], [0], [0]>} : vector<2x8x8xbf16>, vector<2x8x8xbf16>, vector<2x8x8xf32> -> vector<2x8x8xf32>
    "tpu.trace_stop"() : () -> ()
    %cst_21 = arith.constant 0.353553385 : f32
    %67 = vector.broadcast %cst_21 : f32 to vector<2x8x8xf32>
    %68 = arith.mulf %66, %67 : vector<2x8x8xf32>
    %cst_22 = arith.constant dense<0xFF800000> : vector<2x8xf32>
    %69 = vector.multi_reduction <maximumf>, %68, %cst_22 [2] : vector<2x8x8xf32> to vector<2x8xf32>
    %70 = vector.shape_cast %69 : vector<2x8xf32> to vector<2x8x1xf32>
    %71 = vector.broadcast %70 : vector<2x8x1xf32> to vector<2x8x8xf32>
    %72 = arith.subf %68, %71 : vector<2x8x8xf32>
    %73 = math.exp %72 : vector<2x8x8xf32>
    %cst_23 = arith.constant dense<0.000000e+00> : vector<2x8xf32>
    %74 = vector.multi_reduction <add>, %73, %cst_23 [2] : vector<2x8x8xf32> to vector<2x8xf32>
    %75 = vector.shape_cast %74 : vector<2x8xf32> to vector<2x8x1xf32>
    %76 = vector.broadcast %75 : vector<2x8x1xf32> to vector<2x8x8xf32>
    %77 = arith.divf %73, %76 : vector<2x8x8xf32>
    %78 = arith.truncf %77 : vector<2x8x8xf32> to vector<2x8x8xbf16>
    "tpu.trace_start"() <{level = 10 : i32, message = "bqk,bkd->bqd"}> : () -> ()
    %cst_24 = arith.constant dense<0.000000e+00> : vector<2x8x8xf32>
    %79 = tpu.matmul %78, %65, %cst_24 {dimension_numbers = #tpu.dot_dimension_numbers<[2], [1], [1], [2], [0, 0, 0, 1, 1, 2], [0], [0]>} : vector<2x8x8xbf16>, vector<2x8x8xbf16>, vector<2x8x8xf32> -> vector<2x8x8xf32>
    "tpu.trace_stop"() : () -> ()
    %80 = vector.extract_strided_slice %2 {offsets = [16, 96], sizes = [8, 32], strides = [1, 1]} : vector<32x128xbf16> to vector<8x32xbf16>
    %81 = vector.shape_cast %79 : vector<2x8x8xf32> to vector<16x8xf32>
    %82 = arith.truncf %81 : vector<16x8xf32> to vector<16x8xbf16>
    %cst_25 = arith.constant dense<0.000000e+00> : vector<16x32xf32>
    %83 = tpu.matmul %82, %80, %cst_25 {dimension_numbers = #tpu.dot_dimension_numbers<[1], [0], [0], [1], [0, 0, 1, 1], [], []>} : vector<16x8xbf16>, vector<8x32xbf16>, vector<16x32xf32> -> vector<16x32xf32>
    %84 = arith.addf %62, %83 : vector<16x32xf32>
    %85 = vector.extract_strided_slice %11 {offsets = [0, 0, 24], sizes = [2, 8, 8], strides = [1, 1, 1]} : vector<2x8x32xbf16> to vector<2x8x8xbf16>
    %86 = vector.extract_strided_slice %14 {offsets = [0, 0, 24], sizes = [2, 8, 8], strides = [1, 1, 1]} : vector<2x8x32xbf16> to vector<2x8x8xbf16>
    %87 = vector.extract_strided_slice %17 {offsets = [0, 0, 24], sizes = [2, 8, 8], strides = [1, 1, 1]} : vector<2x8x32xbf16> to vector<2x8x8xbf16>
    "tpu.trace_start"() <{level = 10 : i32, message = "bqd,bkd->bqk"}> : () -> ()
    %cst_26 = arith.constant dense<0.000000e+00> : vector<2x8x8xf32>
    %88 = tpu.matmul %85, %86, %cst_26 {dimension_numbers = #tpu.dot_dimension_numbers<[2], [2], [1], [1], [0, 0, 0, 1, 1, 1], [0], [0]>} : vector<2x8x8xbf16>, vector<2x8x8xbf16>, vector<2x8x8xf32> -> vector<2x8x8xf32>
    "tpu.trace_stop"() : () -> ()
    %cst_27 = arith.constant 0.353553385 : f32
    %89 = vector.broadcast %cst_27 : f32 to vector<2x8x8xf32>
    %90 = arith.mulf %88, %89 : vector<2x8x8xf32>
    %cst_28 = arith.constant dense<0xFF800000> : vector<2x8xf32>
    %91 = vector.multi_reduction <maximumf>, %90, %cst_28 [2] : vector<2x8x8xf32> to vector<2x8xf32>
    %92 = vector.shape_cast %91 : vector<2x8xf32> to vector<2x8x1xf32>
    %93 = vector.broadcast %92 : vector<2x8x1xf32> to vector<2x8x8xf32>
    %94 = arith.subf %90, %93 : vector<2x8x8xf32>
    %95 = math.exp %94 : vector<2x8x8xf32>
    %cst_29 = arith.constant dense<0.000000e+00> : vector<2x8xf32>
    %96 = vector.multi_reduction <add>, %95, %cst_29 [2] : vector<2x8x8xf32> to vector<2x8xf32>
    %97 = vector.shape_cast %96 : vector<2x8xf32> to vector<2x8x1xf32>
    %98 = vector.broadcast %97 : vector<2x8x1xf32> to vector<2x8x8xf32>
    %99 = arith.divf %95, %98 : vector<2x8x8xf32>
    %100 = arith.truncf %99 : vector<2x8x8xf32> to vector<2x8x8xbf16>
    "tpu.trace_start"() <{level = 10 : i32, message = "bqk,bkd->bqd"}> : () -> ()
    %cst_30 = arith.constant dense<0.000000e+00> : vector<2x8x8xf32>
    %101 = tpu.matmul %100, %87, %cst_30 {dimension_numbers = #tpu.dot_dimension_numbers<[2], [1], [1], [2], [0, 0, 0, 1, 1, 2], [0], [0]>} : vector<2x8x8xbf16>, vector<2x8x8xbf16>, vector<2x8x8xf32> -> vector<2x8x8xf32>
    "tpu.trace_stop"() : () -> ()
    %102 = vector.extract_strided_slice %2 {offsets = [24, 96], sizes = [8, 32], strides = [1, 1]} : vector<32x128xbf16> to vector<8x32xbf16>
    %103 = vector.shape_cast %101 : vector<2x8x8xf32> to vector<16x8xf32>
    %104 = arith.truncf %103 : vector<16x8xf32> to vector<16x8xbf16>
    %cst_31 = arith.constant dense<0.000000e+00> : vector<16x32xf32>
    %105 = tpu.matmul %104, %102, %cst_31 {dimension_numbers = #tpu.dot_dimension_numbers<[1], [0], [0], [1], [0, 0, 1, 1], [], []>} : vector<16x8xbf16>, vector<8x32xbf16>, vector<16x32xf32> -> vector<16x32xf32>
    %106 = arith.addf %84, %105 : vector<16x32xf32>
    %107 = vector.broadcast %5 : vector<1x32xf32> to vector<16x32xf32>
    %108 = arith.addf %106, %107 : vector<16x32xf32>
    %c2 = arith.constant 2 : index
    %c0_32 = arith.constant 0 : index
    %109 = vector.load %arg5[%c2, %c0_32] : memref<6x32xf32, #tpu.memory_space<vmem>>, vector<1x32xf32>
    %c3 = arith.constant 3 : index
    %c0_33 = arith.constant 0 : index
    %110 = vector.load %arg5[%c3, %c0_33] : memref<6x32xf32, #tpu.memory_space<vmem>>, vector<1x32xf32>
    %111 = arith.addf %0, %108 : vector<16x32xf32>
    %cst_34 = arith.constant dense<0.000000e+00> : vector<16xf32>
    %112 = vector.multi_reduction <add>, %111, %cst_34 [1] : vector<16x32xf32> to vector<16xf32>
    %113 = vector.shape_cast %112 : vector<16xf32> to vector<16x1xf32>
    %cst_35 = arith.constant 3.200000e+01 : f32
    %114 = vector.broadcast %cst_35 : f32 to vector<16x1xf32>
    %115 = arith.divf %113, %114 : vector<16x1xf32>
    %116 = vector.broadcast %115 : vector<16x1xf32> to vector<16x32xf32>
    %117 = arith.subf %111, %116 : vector<16x32xf32>
    %118 = arith.mulf %117, %117 : vector<16x32xf32>
    %cst_36 = arith.constant dense<0.000000e+00> : vector<16xf32>
    %119 = vector.multi_reduction <add>, %118, %cst_36 [1] : vector<16x32xf32> to vector<16xf32>
    %120 = vector.shape_cast %119 : vector<16xf32> to vector<16x1xf32>
    %cst_37 = arith.constant 3.200000e+01 : f32
    %121 = vector.broadcast %cst_37 : f32 to vector<16x1xf32>
    %122 = arith.divf %120, %121 : vector<16x1xf32>
    %123 = vector.broadcast %115 : vector<16x1xf32> to vector<16x32xf32>
    %124 = arith.subf %111, %123 : vector<16x32xf32>
    %cst_38 = arith.constant 9.99999974E-6 : f32
    %125 = vector.broadcast %cst_38 : f32 to vector<16x1xf32>
    %126 = arith.addf %122, %125 : vector<16x1xf32>
    %127 = math.rsqrt %126 : vector<16x1xf32>
    %128 = vector.broadcast %127 : vector<16x1xf32> to vector<16x32xf32>
    %129 = arith.mulf %124, %128 : vector<16x32xf32>
    %130 = vector.broadcast %109 : vector<1x32xf32> to vector<16x32xf32>
    %131 = arith.mulf %129, %130 : vector<16x32xf32>
    %132 = vector.broadcast %110 : vector<1x32xf32> to vector<16x32xf32>
    %133 = arith.addf %131, %132 : vector<16x32xf32>
    %134 = arith.truncf %133 : vector<16x32xf32> to vector<16x32xbf16>
    %c1 = arith.constant 1 : index
    %c0_39 = arith.constant 0 : index
    %135 = vector.load %arg4[%c1, %c0_39] : memref<2x96xf32, #tpu.memory_space<vmem>>, vector<1x96xf32>
    %c0_40 = arith.constant 0 : index
    %c0_41 = arith.constant 0 : index
    %136 = vector.load %arg2[%c0_40, %c0_41] : memref<32x96xbf16, #tpu.memory_space<vmem>>, vector<32x96xbf16>
    %cst_42 = arith.constant dense<0.000000e+00> : vector<16x96xf32>
    %137 = tpu.matmul %134, %136, %cst_42 {dimension_numbers = #tpu.dot_dimension_numbers<[1], [0], [0], [1], [0, 0, 1, 1], [], []>} : vector<16x32xbf16>, vector<32x96xbf16>, vector<16x96xf32> -> vector<16x96xf32>
    %138 = vector.broadcast %135 : vector<1x96xf32> to vector<16x96xf32>
    %139 = arith.addf %137, %138 : vector<16x96xf32>
    %140 = vector.extract_strided_slice %139 {offsets = [0, 0], sizes = [16, 64], strides = [1, 1]} : vector<16x96xf32> to vector<16x64xf32>
    %141 = arith.mulf %140, %140 : vector<16x64xf32>
    %142 = arith.mulf %140, %141 : vector<16x64xf32>
    %cst_43 = arith.constant 4.471500e-02 : f32
    %143 = vector.broadcast %cst_43 : f32 to vector<16x64xf32>
    %144 = arith.mulf %143, %142 : vector<16x64xf32>
    %145 = arith.addf %140, %144 : vector<16x64xf32>
    %cst_44 = arith.constant 0.797884583 : f32
    %146 = vector.broadcast %cst_44 : f32 to vector<16x64xf32>
    %147 = arith.mulf %146, %145 : vector<16x64xf32>
    %148 = math.tanh %147 : vector<16x64xf32>
    %cst_45 = arith.constant 1.000000e+00 : f32
    %149 = vector.broadcast %cst_45 : f32 to vector<16x64xf32>
    %150 = arith.addf %149, %148 : vector<16x64xf32>
    %cst_46 = arith.constant 5.000000e-01 : f32
    %151 = vector.broadcast %cst_46 : f32 to vector<16x64xf32>
    %152 = arith.mulf %151, %150 : vector<16x64xf32>
    %153 = arith.mulf %140, %152 : vector<16x64xf32>
    %154 = vector.extract_strided_slice %139 {offsets = [0, 64], sizes = [16, 32], strides = [1, 1]} : vector<16x96xf32> to vector<16x32xf32>
    %155 = arith.negf %154 : vector<16x32xf32>
    %156 = math.exp %155 : vector<16x32xf32>
    %cst_47 = arith.constant 1.000000e+00 : f32
    %157 = vector.broadcast %cst_47 : f32 to vector<16x32xf32>
    %158 = arith.addf %157, %156 : vector<16x32xf32>
    %159 = arith.divf %157, %158 : vector<16x32xf32>
    %c1_48 = arith.constant 1 : index
    %c0_49 = arith.constant 0 : index
    %160 = vector.load %arg5[%c1_48, %c0_49] : memref<6x32xf32, #tpu.memory_space<vmem>>, vector<1x32xf32>
    %161 = arith.truncf %153 : vector<16x64xf32> to vector<16x64xbf16>
    %c0_50 = arith.constant 0 : index
    %c0_51 = arith.constant 0 : index
    %162 = vector.load %arg3[%c0_50, %c0_51] : memref<64x32xbf16, #tpu.memory_space<vmem>>, vector<64x32xbf16>
    %cst_52 = arith.constant dense<0.000000e+00> : vector<16x32xf32>
    %163 = tpu.matmul %161, %162, %cst_52 {dimension_numbers = #tpu.dot_dimension_numbers<[1], [0], [0], [1], [0, 0, 1, 1], [], []>} : vector<16x64xbf16>, vector<64x32xbf16>, vector<16x32xf32> -> vector<16x32xf32>
    %164 = vector.broadcast %160 : vector<1x32xf32> to vector<16x32xf32>
    %165 = arith.addf %163, %164 : vector<16x32xf32>
    %166 = arith.mulf %159, %165 : vector<16x32xf32>
    %cst_53 = arith.constant 1.000000e+00 : f32
    %167 = vector.broadcast %cst_53 : f32 to vector<16x32xf32>
    %168 = arith.subf %167, %159 : vector<16x32xf32>
    %169 = arith.mulf %168, %133 : vector<16x32xf32>
    %170 = arith.addf %166, %169 : vector<16x32xf32>
    %c4 = arith.constant 4 : index
    %c0_54 = arith.constant 0 : index
    %171 = vector.load %arg5[%c4, %c0_54] : memref<6x32xf32, #tpu.memory_space<vmem>>, vector<1x32xf32>
    %c5 = arith.constant 5 : index
    %c0_55 = arith.constant 0 : index
    %172 = vector.load %arg5[%c5, %c0_55] : memref<6x32xf32, #tpu.memory_space<vmem>>, vector<1x32xf32>
    %173 = arith.addf %133, %170 : vector<16x32xf32>
    %cst_56 = arith.constant dense<0.000000e+00> : vector<16xf32>
    %174 = vector.multi_reduction <add>, %173, %cst_56 [1] : vector<16x32xf32> to vector<16xf32>
    %175 = vector.shape_cast %174 : vector<16xf32> to vector<16x1xf32>
    %cst_57 = arith.constant 3.200000e+01 : f32
    %176 = vector.broadcast %cst_57 : f32 to vector<16x1xf32>
    %177 = arith.divf %175, %176 : vector<16x1xf32>
    %178 = vector.broadcast %177 : vector<16x1xf32> to vector<16x32xf32>
    %179 = arith.subf %173, %178 : vector<16x32xf32>
    %180 = arith.mulf %179, %179 : vector<16x32xf32>
    %cst_58 = arith.constant dense<0.000000e+00> : vector<16xf32>
    %181 = vector.multi_reduction <add>, %180, %cst_58 [1] : vector<16x32xf32> to vector<16xf32>
    %182 = vector.shape_cast %181 : vector<16xf32> to vector<16x1xf32>
    %cst_59 = arith.constant 3.200000e+01 : f32
    %183 = vector.broadcast %cst_59 : f32 to vector<16x1xf32>
    %184 = arith.divf %182, %183 : vector<16x1xf32>
    %185 = vector.broadcast %177 : vector<16x1xf32> to vector<16x32xf32>
    %186 = arith.subf %173, %185 : vector<16x32xf32>
    %cst_60 = arith.constant 9.99999974E-6 : f32
    %187 = vector.broadcast %cst_60 : f32 to vector<16x1xf32>
    %188 = arith.addf %184, %187 : vector<16x1xf32>
    %189 = math.rsqrt %188 : vector<16x1xf32>
    %190 = vector.broadcast %189 : vector<16x1xf32> to vector<16x32xf32>
    %191 = arith.mulf %186, %190 : vector<16x32xf32>
    %192 = vector.broadcast %171 : vector<1x32xf32> to vector<16x32xf32>
    %193 = arith.mulf %191, %192 : vector<16x32xf32>
    %194 = vector.broadcast %172 : vector<1x32xf32> to vector<16x32xf32>
    %195 = arith.addf %193, %194 : vector<16x32xf32>
    %c0_61 = arith.constant 0 : index
    %c0_62 = arith.constant 0 : index
    %196 = vector.load %arg6[%c0_61, %c0_62] : memref<16x32xf32, #tpu.memory_space<vmem>>, vector<16x32xf32>
    tpu.vector_store %arg6[%c0_61, %c0_62], %195 {strides = array<i32>} : memref<16x32xf32, #tpu.memory_space<vmem>>, vector<16x32xf32>,
    return
  }
}

</mosaic_0001>

<llo_original>
// kernel: encoder_layer.1
$region0: #{encoder_layer.1}
  #allocation0 [shape = 'u32[]', space=smem, size = 0x4, offset = 0x4, fixed_abs, tag = 'smem constant byte address 0x4 - core index']
  #allocation1 [shape = 'u32[72,128]{1,0:T(1,128)}', space=vmem, size = 0x9000, scoped, tag = 'internal scratch']
  %s0 = inlined_call_operand.vmem [shape: f32[16,32], index: 0, kind: input, shape index: {}]
  %s1 = inlined_call_operand.vmem [shape: bf16[32,128], index: 1, kind: input, shape index: {}]
  %s2 = inlined_call_operand.vmem [shape: bf16[32,96], index: 2, kind: input, shape index: {}]
  %s3 = inlined_call_operand.vmem [shape: bf16[64,32], index: 3, kind: input, shape index: {}]
  %s4 = inlined_call_operand.vmem [shape: f32[2,96], index: 4, kind: input, shape index: {}]
  %s5 = inlined_call_operand.hbm [shape: f32[6,32], index: 5, kind: input, shape index: {}]
  %s6 = inlined_call_operand.hbm [shape: f32[16,32], index: 6, kind: output, shape index: {}]
  %s7 = sld [smem:[#allocation0]]
  $region38: #{encoder_layer.1} parent=0
    _
  %s9 = ssub.s32 1, %s7
  %s10 = scalar_select 0, %s9, %s7
  $region1: #{encoder_layer.1} parent=0
    #allocation2 [shape = 'u8[4096]{0}', space=vmem, size = 0x1000, scoped, tag = 'input window, operand 5, single buffered']
    #allocation3 [shape = 's32[1]{0}', space=sflag, size = 0x4, scoped, tag = 'scoped memory for encoder_layer.1']
    #allocation4 [shape = 's32[1]{0}', space=sflag, size = 0x4, scoped, tag = 'scoped memory for encoder_layer.1']
    #allocation5 [shape = 'u8[8192]{0}', space=vmem, size = 0x2000, scoped, tag = 'output window, operand 0, single buffered']
    %11 = vsyncpa [#allocation3], 0
    %12 = vsyncpa [#allocation4], 0
    // Predicated region
    $region2: #{encoder_layer.1} parent=1 // pred_check
      _
    $region3: #{encoder_layer.1} parent=1 // pred_check_branch
      %14 = sbr.rel (0) target = $region5
    $region4: #{encoder_layer.1} parent=1 // pred_region
      _
    $region5: #{encoder_layer.1} parent=1 // pred_fallthru
      _
    // Predicated region
    $region6: #{encoder_layer.1} parent=1 // pred_check
      _
    $region7: #{encoder_layer.1} parent=1 // pred_check_branch
      %16 = sbr.rel (0) target = $region9
    $region8: #{encoder_layer.1} parent=1 // pred_region
      _
    $region9: #{encoder_layer.1} parent=1 // pred_fallthru
      _
    // Predicated region
    $region10: #{encoder_layer.1} parent=1 // pred_check
      _
    $region11: #{encoder_layer.1} parent=1 // pred_check_branch
      %18 = sbr.rel (0) target = $region13
    $region12: #{encoder_layer.1} parent=1 // pred_region
      _
    $region13: #{encoder_layer.1} parent=1 // pred_fallthru
      _
    // Predicated region
    $region14: #{encoder_layer.1} parent=1 // pred_check
      _
    $region15: #{encoder_layer.1} parent=1 // pred_check_branch
      %20 = sbr.rel (0) target = $region17
    $region16: #{encoder_layer.1} parent=1 // pred_region
      _
    $region17: #{encoder_layer.1} parent=1 // pred_fallthru
      _
    // Predicated region
    $region18: #{encoder_layer.1} parent=1 // pred_check
      _
    $region19: #{encoder_layer.1} parent=1 // pred_check_branch
      %22 = sbr.rel (0) target = $region21
    $region20: #{encoder_layer.1} parent=1 // pred_region
      _
    $region21: #{encoder_layer.1} parent=1 // pred_fallthru
      _
    // Predicated region
    $region22: #{encoder_layer.1} parent=1 // pred_check
      _
    $region23: #{encoder_layer.1} parent=1 // pred_check_branch
      %24 = sbr.rel (0) target = $region25
    $region24: #{encoder_layer.1} parent=1 // pred_region
      %26 = vsyncadd [#allocation3], 0
      %s28 = sshll.u32 %s5, 4
      %s29 = int_to_ptr.hbm [resolvable:$true] %s28
      %s30 = sshll.u32 [#allocation2], 4
      %s31 = int_to_ptr.vmem [resolvable:$true] %s30
      %33 = dma.hbm_to_vmem [thread:$0]  %s29, 128, %s31, [#allocation3]
    $region25: #{encoder_layer.1} parent=1 // pred_fallthru
      _
    // Predicated region
    $region26: #{encoder_layer.1} parent=1 // pred_check
      _
    $region27: #{encoder_layer.1} parent=1 // pred_check_branch
      %35 = sbr.rel (0) target = $region29
    $region28: #{encoder_layer.1} parent=1 // pred_region
      %37 = dma.done [#allocation3], 128
    $region29: #{encoder_layer.1} parent=1 // pred_fallthru
      _
    %v39 = vld [vmem:[%s0] sm:$0xff]
    %v40 = vld [vmem:[%s0 + $0x8] sm:$0xff]
    %v41 = vpack.c.bf16 %v40, %v39
    %v42 = vld [vmem:[%s1] sm:$0xf]
    %v43 = vld [vmem:[%s1 + $0x4] sm:$0xf]
    %v44 = vld [vmem:[%s1 + $0x8] sm:$0xf]
    %v45 = vld [vmem:[%s1 + $0xc] sm:$0xf]
    %v46 = vld [vmem:[%s4] sm:$0x1]
    %v47 = vld [vmem:[#allocation2] sm:$0x1]
    %v48 = vperm.slane %v46, 0
    %v53 = vunpack.c.l.b16 %v42
    %v54 = vunpack.c.l.b16 %v43
    %v55 = vunpack.c.l.b16 %v44
    %v56 = vunpack.c.l.b16 %v45
    %v57 = vpack.c.b16 %v54, %v53
    %v58 = vpack.c.b16 %v56, %v55
    %vm61 = vcmask 261120
    %v63 = vsel %vm61, %v41, 0
    %65 = vmatpush.bf16.msra.mxu0 0
    %66 = vmatpush.bf16.msra.mxu0 0
    %67 = vmatpush.bf16.msra.mxu0 0
    %68 = vmatpush.bf16.msra.mxu0 0
    %69 = vmatpush.bf16.msra.mxu0 0
    %70 = vmatpush.bf16.msra.mxu0 0
    %71 = vmatpush.bf16.msra.mxu0 %v58
    %72 = vmatpush.bf16.msra.mxu0 %v57
    %73 = vmatmul.bf16.gmra.mxu0 %v63
    %v74 = vpop.f32.mrf.mxu0
    %v75 = vadd.f32 %v48, %v74
    %v76 = vpop.f32.mrf.mxu0
    %v77 = vadd.f32 %v48, %v76
    %78 = vdwg.mxu0
    %v79 = vpack.c.bf16 %v75, %v75
    %v80 = vpack.c.bf16 %v77, %v77
    %v82 = vunpack.c.l.b16 %v79
    %v83 = vpack.c.b16 %v82, %v82
    %84 = vrot.lane.b32.xlu0 %v83, 96
    %v85 = vpop.permute.xlu0 %84
    %vm86 = vcmask 64512
    %v88 = vsel %vm86, %v79, 0
    %v91 = vsel %vm86, %v85, 0
    %93 = vmatpush.bf16.xpose.msra.mxu0 0
    %94 = vmatpush.bf16.xpose.msra.mxu0 0
    %95 = vmatpush.bf16.xpose.msra.mxu0 0
    %96 = vmatpush.bf16.xpose.msra.mxu0 0
    %97 = vmatpush.bf16.xpose.msra.mxu0 0
    %98 = vmatpush.bf16.xpose.msra.mxu0 0
    %99 = vmatpush.bf16.xpose.msra.mxu0 0
    %100 = vmatpush.bf16.xpose.msra.mxu0 %v91
    %101 = vmatmul.bf16.gmra.mxu0 %v88
    %v102 = vpop.f32.mrf.mxu0
    %v103 = vadd.f32 0.0, %v102
    %v104 = vpop.f32.mrf.mxu0
    %105 = vdwg.mxu0
    %v107 = vunpack.c.l.b16 %v80
    %v108 = vpack.c.b16 %v107, %v107
    %109 = vrot.lane.b32.xlu0 %v108, 96
    %v110 = vpop.permute.xlu0 %109
    %v112 = vsel %vm86, %v80, 0
    %v115 = vsel %vm86, %v110, 0
    %117 = vmatpush.bf16.xpose.msra.mxu0 0
    %118 = vmatpush.bf16.xpose.msra.mxu0 0
    %119 = vmatpush.bf16.xpose.msra.mxu0 0
    %120 = vmatpush.bf16.xpose.msra.mxu0 0
    %121 = vmatpush.bf16.xpose.msra.mxu0 0
    %122 = vmatpush.bf16.xpose.msra.mxu0 0
    %123 = vmatpush.bf16.xpose.msra.mxu0 0
    %124 = vmatpush.bf16.xpose.msra.mxu0 %v115
    %125 = vmatmul.bf16.gmra.mxu0 %v112
    %v126 = vpop.f32.mrf.mxu0
    %v127 = vadd.f32 0.0, %v126
    %v128 = vpop.f32.mrf.mxu0
    %129 = vdwg.mxu0
    %v130 = vmul.f32 %v103, 0.35355338
    %v131 = vmul.f32 %v127, 0.35355338
    %v132 = vsel %vm86, %v130, -inf
    %133 = vmax.xlane.f32.xlu0 %v132
    %v134 = vpop.xlane.xlu0 %133
    %v135 = vsel %vm86, %v131, -inf
    %136 = vmax.xlane.f32.xlu0 %v135
    %v137 = vpop.xlane.xlu0 %136
    %v138 = vsub.f32 %v130, %v134
    %v139 = vsub.f32 %v131, %v137
    %v140 = vmul.f32 %v138, 1.442695
    %v141 = vpow.pop %v140
    %v142 = vmul.f32 %v139, 1.442695
    %v143 = vpow.pop %v142
    %v144 = vsel %vm86, %v141, 0.0
    %145 = vadd.xlane.f32.xlu0 %v144
    %v146 = vpop.xlane.xlu0 %145
    %v147 = vsel %vm86, %v143, 0.0
    %148 = vadd.xlane.f32.xlu0 %v147
    %v149 = vpop.xlane.xlu0 %148
    %v150 = vrcp.pop %v146
    %v151 = vmul.f32 %v146, %v150
    %v152 = vsub.f32 1.0, %v151
    %v153 = vmul.f32 %v150, %v152
    %v154 = vadd.f32 %v150, %v153
    %vm155 = vweird.f32 %v146
    %vm156 = vweird.f32 %v150
    %vm157 = vmor %vm155, %vm156
    %v158 = vsel %vm157, %v150, %v154
    %v159 = vand.u32 2147483647, %v146
    %vm160 = vcmp.eq.f32.partialorder %v159, 8.507059e+37
    %v161 = vand.u32 %v146, 2147483648
    %v162 = vor.u32 1.1754944e-38, %v161
    %v163 = vsel %vm160, %v162, %v158
    %v164 = vmul.f32 %v141, %v163
    %v165 = vrcp.pop %v149
    %v166 = vmul.f32 %v149, %v165
    %v167 = vsub.f32 1.0, %v166
    %v168 = vmul.f32 %v165, %v167
    %v169 = vadd.f32 %v165, %v168
    %vm170 = vweird.f32 %v149
    %vm171 = vweird.f32 %v165
    %vm172 = vmor %vm170, %vm171
    %v173 = vsel %vm172, %v165, %v169
    %v174 = vand.u32 2147483647, %v149
    %vm175 = vcmp.eq.f32.partialorder %v174, 8.507059e+37
    %v176 = vand.u32 %v149, 2147483648
    %v177 = vor.u32 1.1754944e-38, %v176
    %v178 = vsel %vm175, %v177, %v173
    %v179 = vmul.f32 %v143, %v178
    %v180 = vpack.c.bf16 %v164, %v164
    %v181 = vpack.c.bf16 %v179, %v179
    %182 = vrot.lane.b32.xlu0 %v83, 64
    %v183 = vpop.permute.xlu0 %182
    %v185 = vsel %vm86, %v180, 0
    %vm187 = vcmask 1043456
    %v189 = vsel %vm187, %v183, 0
    %191 = vmatpush.bf16.msra.mxu0 0
    %192 = vmatpush.bf16.msra.mxu0 0
    %193 = vmatpush.bf16.msra.mxu0 0
    %194 = vmatpush.bf16.msra.mxu0 0
    %195 = vmatpush.bf16.msra.mxu0 0
    %196 = vmatpush.bf16.msra.mxu0 0
    %197 = vmatpush.bf16.msra.mxu0 0
    %198 = vmatpush.bf16.msra.mxu0 %v189
    %199 = vmatmul.bf16.gmra.mxu0 %v185
    %v200 = vpop.f32.mrf.mxu0
    %v201 = vadd.f32 0.0, %v200
    %v202 = vpop.f32.mrf.mxu0
    %203 = vdwg.mxu0
    %204 = vrot.lane.b32.xlu0 %v108, 64
    %v205 = vpop.permute.xlu0 %204
    %v207 = vsel %vm86, %v181, 0
    %v210 = vsel %vm187, %v205, 0
    %212 = vmatpush.bf16.msra.mxu0 0
    %213 = vmatpush.bf16.msra.mxu0 0
    %214 = vmatpush.bf16.msra.mxu0 0
    %215 = vmatpush.bf16.msra.mxu0 0
    %216 = vmatpush.bf16.msra.mxu0 0
    %217 = vmatpush.bf16.msra.mxu0 0
    %218 = vmatpush.bf16.msra.mxu0 0
    %219 = vmatpush.bf16.msra.mxu0 %v210
    %220 = vmatmul.bf16.gmra.mxu0 %v207
    %v221 = vpop.f32.mrf.mxu0
    %v222 = vadd.f32 0.0, %v221
    %v223 = vpop.f32.mrf.mxu0
    %224 = vdwg.mxu0
    %v225 = vpack.c.bf16 %v222, %v201
    %226 = vrot.lane.b32.xlu0 %v83, 120
    %v227 = vpop.permute.xlu0 %226
    %228 = vrot.lane.b32.xlu0 %v83, 88
    %v229 = vpop.permute.xlu0 %228
    %v231 = vsel %vm86, %v227, 0
    %v234 = vsel %vm86, %v229, 0
    %236 = vmatpush.bf16.xpose.msra.mxu0 0
    %237 = vmatpush.bf16.xpose.msra.mxu0 0
    %238 = vmatpush.bf16.xpose.msra.mxu0 0
    %239 = vmatpush.bf16.xpose.msra.mxu0 0
    %240 = vmatpush.bf16.xpose.msra.mxu0 0
    %241 = vmatpush.bf16.xpose.msra.mxu0 0
    %242 = vmatpush.bf16.xpose.msra.mxu0 0
    %243 = vmatpush.bf16.xpose.msra.mxu0 %v234
    %244 = vmatmul.bf16.gmra.mxu0 %v231
    %v245 = vpop.f32.mrf.mxu0
    %v246 = vadd.f32 0.0, %v245
    %v247 = vpop.f32.mrf.mxu0
    %248 = vdwg.mxu0
    %249 = vrot.lane.b32.xlu0 %v108, 120
    %v250 = vpop.permute.xlu0 %249
    %251 = vrot.lane.b32.xlu0 %v108, 88
    %v252 = vpop.permute.xlu0 %251
    %v254 = vsel %vm86, %v250, 0
    %v257 = vsel %vm86, %v252, 0
    %259 = vmatpush.bf16.xpose.msra.mxu0 0
    %260 = vmatpush.bf16.xpose.msra.mxu0 0
    %261 = vmatpush.bf16.xpose.msra.mxu0 0
    %262 = vmatpush.bf16.xpose.msra.mxu0 0
    %263 = vmatpush.bf16.xpose.msra.mxu0 0
    %264 = vmatpush.bf16.xpose.msra.mxu0 0
    %265 = vmatpush.bf16.xpose.msra.mxu0 0
    %266 = vmatpush.bf16.xpose.msra.mxu0 %v257
    %267 = vmatmul.bf16.gmra.mxu0 %v254
    %v268 = vpop.f32.mrf.mxu0
    %v269 = vadd.f32 0.0, %v268
    %v270 = vpop.f32.mrf.mxu0
    %271 = vdwg.mxu0
    %v272 = vmul.f32 %v246, 0.35355338
    %v273 = vmul.f32 %v269, 0.35355338
    %v274 = vsel %vm86, %v272, -inf
    %275 = vmax.xlane.f32.xlu0 %v274
    %v276 = vpop.xlane.xlu0 %275
    %v277 = vsel %vm86, %v273, -inf
    %278 = vmax.xlane.f32.xlu0 %v277
    %v279 = vpop.xlane.xlu0 %278
    %v280 = vsub.f32 %v272, %v276
    %v281 = vsub.f32 %v273, %v279
    %v282 = vmul.f32 %v280, 1.442695
    %v283 = vpow.pop %v282
    %v284 = vmul.f32 %v281, 1.442695
    %v285 = vpow.pop %v284
    %v286 = vsel %vm86, %v283, 0.0
    %287 = vadd.xlane.f32.xlu0 %v286
    %v288 = vpop.xlane.xlu0 %287
    %v289 = vsel %vm86, %v285, 0.0
    %290 = vadd.xlane.f32.xlu0 %v289
    %v291 = vpop.xlane.xlu0 %290
    %v292 = vrcp.pop %v288
    %v293 = vmul.f32 %v288, %v292
    %v294 = vsub.f32 1.0, %v293
    %v295 = vmul.f32 %v292, %v294
    %v296 = vadd.f32 %v292, %v295
    %vm297 = vweird.f32 %v288
    %vm298 = vweird.f32 %v292
    %vm299 = vmor %vm297, %vm298
    %v300 = vsel %vm299, %v292, %v296
    %v301 = vand.u32 2147483647, %v288
    %vm302 = vcmp.eq.f32.partialorder %v301, 8.507059e+37
    %v303 = vand.u32 %v288, 2147483648
    %v304 = vor.u32 1.1754944e-38, %v303
    %v305 = vsel %vm302, %v304, %v300
    %v306 = vmul.f32 %v283, %v305
    %v307 = vrcp.pop %v291
    %v308 = vmul.f32 %v291, %v307
    %v309 = vsub.f32 1.0, %v308
    %v310 = vmul.f32 %v307, %v309
    %v311 = vadd.f32 %v307, %v310
    %vm312 = vweird.f32 %v291
    %vm313 = vweird.f32 %v307
    %vm314 = vmor %vm312, %vm313
    %v315 = vsel %vm314, %v307, %v311
    %v316 = vand.u32 2147483647, %v291
    %vm317 = vcmp.eq.f32.partialorder %v316, 8.507059e+37
    %v318 = vand.u32 %v291, 2147483648
    %v319 = vor.u32 1.1754944e-38, %v318
    %v320 = vsel %vm317, %v319, %v315
    %v321 = vmul.f32 %v285, %v320
    %v322 = vpack.c.bf16 %v306, %v306
    %v323 = vpack.c.bf16 %v321, %v321
    %324 = vrot.lane.b32.xlu0 %v83, 56
    %v325 = vpop.permute.xlu0 %324
    %v327 = vsel %vm86, %v322, 0
    %v330 = vsel %vm187, %v325, 0
    %332 = vmatpush.bf16.msra.mxu0 0
    %333 = vmatpush.bf16.msra.mxu0 0
    %334 = vmatpush.bf16.msra.mxu0 0
    %335 = vmatpush.bf16.msra.mxu0 0
    %336 = vmatpush.bf16.msra.mxu0 0
    %337 = vmatpush.bf16.msra.mxu0 0
    %338 = vmatpush.bf16.msra.mxu0 0
    %339 = vmatpush.bf16.msra.mxu0 %v330
    %340 = vmatmul.bf16.gmra.mxu0 %v327
    %v341 = vpop.f32.mrf.mxu0
    %v342 = vadd.f32 0.0, %v341
    %v343 = vpop.f32.mrf.mxu0
    %344 = vdwg.mxu0
    %345 = vrot.lane.b32.xlu0 %v108, 56
    %v346 = vpop.permute.xlu0 %345
    %v348 = vsel %vm86, %v323, 0
    %v351 = vsel %vm187, %v346, 0
    %353 = vmatpush.bf16.msra.mxu0 0
    %354 = vmatpush.bf16.msra.mxu0 0
    %355 = vmatpush.bf16.msra.mxu0 0
    %356 = vmatpush.bf16.msra.mxu0 0
    %357 = vmatpush.bf16.msra.mxu0 0
    %358 = vmatpush.bf16.msra.mxu0 0
    %359 = vmatpush.bf16.msra.mxu0 0
    %360 = vmatpush.bf16.msra.mxu0 %v351
    %361 = vmatmul.bf16.gmra.mxu0 %v348
    %v362 = vpop.f32.mrf.mxu0
    %v363 = vadd.f32 0.0, %v362
    %v364 = vpop.f32.mrf.mxu0
    %365 = vdwg.mxu0
    %v366 = vpack.c.bf16 %v363, %v342
    %v367 = vpack.c.b16 %v54, %v54
    %368 = vrot.lane.b32.xlu0 %v367, 32
    %v369 = vpop.permute.xlu0 %368
    %v371 = vsel %vm86, %v366, 0
    %v374 = vsel %vm187, %v369, 0
    %376 = vmatpush.bf16.msra.mxu0 0
    %377 = vmatpush.bf16.msra.mxu0 0
    %378 = vmatpush.bf16.msra.mxu0 0
    %379 = vmatpush.bf16.msra.mxu0 0
    %380 = vmatpush.bf16.msra.mxu0 0
    %381 = vmatpush.bf16.msra.mxu0 0
    %382 = vmatpush.bf16.msra.mxu0 0
    %383 = vmatpush.bf16.msra.mxu0 %v374
    %384 = vmatmul.bf16.gmra.mxu0 %v371
    %v385 = vpop.f32.mrf.mxu0
    %v386 = vadd.f32 0.0, %v385
    %v387 = vpop.f32.mrf.mxu0
    %v388 = vadd.f32 0.0, %v387
    %389 = vdwg.mxu0
    %v390 = vpack.c.b16 %v53, %v53
    %391 = vrot.lane.b32.xlu0 %v390, 32
    %v392 = vpop.permute.xlu0 %391
    %v394 = vsel %vm86, %v225, 0
    %v397 = vsel %vm187, %v392, 0
    %399 = vmatpush.bf16.msra.mxu0 0
    %400 = vmatpush.bf16.msra.mxu0 0
    %401 = vmatpush.bf16.msra.mxu0 0
    %402 = vmatpush.bf16.msra.mxu0 0
    %403 = vmatpush.bf16.msra.mxu0 0
    %404 = vmatpush.bf16.msra.mxu0 0
    %405 = vmatpush.bf16.msra.mxu0 0
    %406 = vmatpush.bf16.msra.mxu0 %v397
    %407 = vmatmul.bf16.gmra.mxu0 %v394
    %v408 = vpop.f32.mrf.mxu0
    %v409 = vadd.f32 %v386, %v408
    %v410 = vpop.f32.mrf.mxu0
    %v411 = vadd.f32 %v388, %v410
    %412 = vdwg.mxu0
    %413 = vrot.lane.b32.xlu0 %v83, 112
    %v414 = vpop.permute.xlu0 %413
    %415 = vrot.lane.b32.xlu0 %v83, 80
    %v416 = vpop.permute.xlu0 %415
    %v418 = vsel %vm86, %v414, 0
    %v421 = vsel %vm86, %v416, 0
    %423 = vmatpush.bf16.xpose.msra.mxu0 0
    %424 = vmatpush.bf16.xpose.msra.mxu0 0
    %425 = vmatpush.bf16.xpose.msra.mxu0 0
    %426 = vmatpush.bf16.xpose.msra.mxu0 0
    %427 = vmatpush.bf16.xpose.msra.mxu0 0
    %428 = vmatpush.bf16.xpose.msra.mxu0 0
    %429 = vmatpush.bf16.xpose.msra.mxu0 0
    %430 = vmatpush.bf16.xpose.msra.mxu0 %v421
    %431 = vmatmul.bf16.gmra.mxu0 %v418
    %v432 = vpop.f32.mrf.mxu0
    %v433 = vadd.f32 0.0, %v432
    %v434 = vpop.f32.mrf.mxu0
    %435 = vdwg.mxu0
    %436 = vrot.lane.b32.xlu0 %v108, 112
    %v437 = vpop.permute.xlu0 %436
    %438 = vrot.lane.b32.xlu0 %v108, 80
    %v439 = vpop.permute.xlu0 %438
    %v441 = vsel %vm86, %v437, 0
    %v444 = vsel %vm86, %v439, 0
    %446 = vmatpush.bf16.xpose.msra.mxu0 0
    %447 = vmatpush.bf16.xpose.msra.mxu0 0
    %448 = vmatpush.bf16.xpose.msra.mxu0 0
    %449 = vmatpush.bf16.xpose.msra.mxu0 0
    %450 = vmatpush.bf16.xpose.msra.mxu0 0
    %451 = vmatpush.bf16.xpose.msra.mxu0 0
    %452 = vmatpush.bf16.xpose.msra.mxu0 0
    %453 = vmatpush.bf16.xpose.msra.mxu0 %v444
    %454 = vmatmul.bf16.gmra.mxu0 %v441
    %v455 = vpop.f32.mrf.mxu0
    %v456 = vadd.f32 0.0, %v455
    %v457 = vpop.f32.mrf.mxu0
    %458 = vdwg.mxu0
    %v459 = vmul.f32 %v433, 0.35355338
    %v460 = vmul.f32 %v456, 0.35355338
    %v461 = vsel %vm86, %v459, -inf
    %462 = vmax.xlane.f32.xlu0 %v461
    %v463 = vpop.xlane.xlu0 %462
    %v464 = vsel %vm86, %v460, -inf
    %465 = vmax.xlane.f32.xlu0 %v464
    %v466 = vpop.xlane.xlu0 %465
    %v467 = vsub.f32 %v459, %v463
    %v468 = vsub.f32 %v460, %v466
    %v469 = vmul.f32 %v467, 1.442695
    %v470 = vpow.pop %v469
    %v471 = vmul.f32 %v468, 1.442695
    %v472 = vpow.pop %v471
    %v473 = vsel %vm86, %v470, 0.0
    %474 = vadd.xlane.f32.xlu0 %v473
    %v475 = vpop.xlane.xlu0 %474
    %v476 = vsel %vm86, %v472, 0.0
    %477 = vadd.xlane.f32.xlu0 %v476
    %v478 = vpop.xlane.xlu0 %477
    %v479 = vrcp.pop %v475
    %v480 = vmul.f32 %v475, %v479
    %v481 = vsub.f32 1.0, %v480
    %v482 = vmul.f32 %v479, %v481
    %v483 = vadd.f32 %v479, %v482
    %vm484 = vweird.f32 %v475
    %vm485 = vweird.f32 %v479
    %vm486 = vmor %vm484, %vm485
    %v487 = vsel %vm486, %v479, %v483
    %v488 = vand.u32 2147483647, %v475
    %vm489 = vcmp.eq.f32.partialorder %v488, 8.507059e+37
    %v490 = vand.u32 %v475, 2147483648
    %v491 = vor.u32 1.1754944e-38, %v490
    %v492 = vsel %vm489, %v491, %v487
    %v493 = vmul.f32 %v470, %v492
    %v494 = vrcp.pop %v478
    %v495 = vmul.f32 %v478, %v494
    %v496 = vsub.f32 1.0, %v495
    %v497 = vmul.f32 %v494, %v496
    %v498 = vadd.f32 %v494, %v497
    %vm499 = vweird.f32 %v478
    %vm500 = vweird.f32 %v494
    %vm501 = vmor %vm499, %vm500
    %v502 = vsel %vm501, %v494, %v498
    %v503 = vand.u32 2147483647, %v478
    %vm504 = vcmp.eq.f32.partialorder %v503, 8.507059e+37
    %v505 = vand.u32 %v478, 2147483648
    %v506 = vor.u32 1.1754944e-38, %v505
    %v507 = vsel %vm504, %v506, %v502
    %v508 = vmul.f32 %v472, %v507
    %v509 = vpack.c.bf16 %v493, %v493
    %v510 = vpack.c.bf16 %v508, %v508
    %511 = vrot.lane.b32.xlu0 %v83, 48
    %v512 = vpop.permute.xlu0 %511
    %v514 = vsel %vm86, %v509, 0
    %v517 = vsel %vm187, %v512, 0
    %519 = vmatpush.bf16.msra.mxu0 0
    %520 = vmatpush.bf16.msra.mxu0 0
    %521 = vmatpush.bf16.msra.mxu0 0
    %522 = vmatpush.bf16.msra.mxu0 0
    %523 = vmatpush.bf16.msra.mxu0 0
    %524 = vmatpush.bf16.msra.mxu0 0
    %525 = vmatpush.bf16.msra.mxu0 0
    %526 = vmatpush.bf16.msra.mxu0 %v517
    %527 = vmatmul.bf16.gmra.mxu0 %v514
    %v528 = vpop.f32.mrf.mxu0
    %v529 = vadd.f32 0.0, %v528
    %v530 = vpop.f32.mrf.mxu0
    %531 = vdwg.mxu0
    %532 = vrot.lane.b32.xlu0 %v108, 48
    %v533 = vpop.permute.xlu0 %532
    %v535 = vsel %vm86, %v510, 0
    %v538 = vsel %vm187, %v533, 0
    %540 = vmatpush.bf16.msra.mxu0 0
    %541 = vmatpush.bf16.msra.mxu0 0
    %542 = vmatpush.bf16.msra.mxu0 0
    %543 = vmatpush.bf16.msra.mxu0 0
    %544 = vmatpush.bf16.msra.mxu0 0
    %545 = vmatpush.bf16.msra.mxu0 0
    %546 = vmatpush.bf16.msra.mxu0 0
    %547 = vmatpush.bf16.msra.mxu0 %v538
    %548 = vmatmul.bf16.gmra.mxu0 %v535
    %v549 = vpop.f32.mrf.mxu0
    %v550 = vadd.f32 0.0, %v549
    %v551 = vpop.f32.mrf.mxu0
    %552 = vdwg.mxu0
    %v553 = vpack.c.bf16 %v550, %v529
    %v554 = vpack.c.b16 %v55, %v55
    %555 = vrot.lane.b32.xlu0 %v554, 32
    %v556 = vpop.permute.xlu0 %555
    %v558 = vsel %vm86, %v553, 0
    %v561 = vsel %vm187, %v556, 0
    %563 = vmatpush.bf16.msra.mxu0 0
    %564 = vmatpush.bf16.msra.mxu0 0
    %565 = vmatpush.bf16.msra.mxu0 0
    %566 = vmatpush.bf16.msra.mxu0 0
    %567 = vmatpush.bf16.msra.mxu0 0
    %568 = vmatpush.bf16.msra.mxu0 0
    %569 = vmatpush.bf16.msra.mxu0 0
    %570 = vmatpush.bf16.msra.mxu0 %v561
    %571 = vmatmul.bf16.gmra.mxu0 %v558
    %v572 = vpop.f32.mrf.mxu0
    %v573 = vadd.f32 0.0, %v572
    %v574 = vpop.f32.mrf.mxu0
    %v575 = vadd.f32 0.0, %v574
    %576 = vdwg.mxu0
    %v577 = vadd.f32 %v409, %v573
    %v578 = vadd.f32 %v411, %v575
    %579 = vrot.lane.b32.xlu0 %v83, 104
    %v580 = vpop.permute.xlu0 %579
    %581 = vrot.lane.b32.xlu0 %v83, 72
    %v582 = vpop.permute.xlu0 %581
    %v584 = vsel %vm86, %v580, 0
    %v587 = vsel %vm86, %v582, 0
    %589 = vmatpush.bf16.xpose.msra.mxu0 0
    %590 = vmatpush.bf16.xpose.msra.mxu0 0
    %591 = vmatpush.bf16.xpose.msra.mxu0 0
    %592 = vmatpush.bf16.xpose.msra.mxu0 0
    %593 = vmatpush.bf16.xpose.msra.mxu0 0
    %594 = vmatpush.bf16.xpose.msra.mxu0 0
    %595 = vmatpush.bf16.xpose.msra.mxu0 0
    %596 = vmatpush.bf16.xpose.msra.mxu0 %v587
    %597 = vmatmul.bf16.gmra.mxu0 %v584
    %v598 = vpop.f32.mrf.mxu0
    %v599 = vadd.f32 0.0, %v598
    %v600 = vpop.f32.mrf.mxu0
    %601 = vdwg.mxu0
    %602 = vrot.lane.b32.xlu0 %v108, 104
    %v603 = vpop.permute.xlu0 %602
    %604 = vrot.lane.b32.xlu0 %v108, 72
    %v605 = vpop.permute.xlu0 %604
    %v607 = vsel %vm86, %v603, 0
    %v610 = vsel %vm86, %v605, 0
    %612 = vmatpush.bf16.xpose.msra.mxu0 0
    %613 = vmatpush.bf16.xpose.msra.mxu0 0
    %614 = vmatpush.bf16.xpose.msra.mxu0 0
    %615 = vmatpush.bf16.xpose.msra.mxu0 0
    %616 = vmatpush.bf16.xpose.msra.mxu0 0
    %617 = vmatpush.bf16.xpose.msra.mxu0 0
    %618 = vmatpush.bf16.xpose.msra.mxu0 0
    %619 = vmatpush.bf16.xpose.msra.mxu0 %v610
    %620 = vmatmul.bf16.gmra.mxu0 %v607
    %v621 = vpop.f32.mrf.mxu0
    %v622 = vadd.f32 0.0, %v621
    %v623 = vpop.f32.mrf.mxu0
    %624 = vdwg.mxu0
    %v625 = vmul.f32 %v599, 0.35355338
    %v626 = vmul.f32 %v622, 0.35355338
    %v627 = vsel %vm86, %v625, -inf
    %628 = vmax.xlane.f32.xlu0 %v627
    %v629 = vpop.xlane.xlu0 %628
    %v630 = vsel %vm86, %v626, -inf
    %631 = vmax.xlane.f32.xlu0 %v630
    %v632 = vpop.xlane.xlu0 %631
    %v633 = vsub.f32 %v625, %v629
    %v634 = vsub.f32 %v626, %v632
    %v635 = vmul.f32 %v633, 1.442695
    %v636 = vpow.pop %v635
    %v637 = vmul.f32 %v634, 1.442695
    %v638 = vpow.pop %v637
    %v639 = vsel %vm86, %v636, 0.0
    %640 = vadd.xlane.f32.xlu0 %v639
    %v641 = vpop.xlane.xlu0 %640
    %v642 = vsel %vm86, %v638, 0.0
    %643 = vadd.xlane.f32.xlu0 %v642
    %v644 = vpop.xlane.xlu0 %643
    %v645 = vrcp.pop %v641
    %v646 = vmul.f32 %v641, %v645
    %v647 = vsub.f32 1.0, %v646
    %v648 = vmul.f32 %v645, %v647
    %v649 = vadd.f32 %v645, %v648
    %vm650 = vweird.f32 %v641
    %vm651 = vweird.f32 %v645
    %vm652 = vmor %vm650, %vm651
    %v653 = vsel %vm652, %v645, %v649
    %v654 = vand.u32 2147483647, %v641
    %vm655 = vcmp.eq.f32.partialorder %v654, 8.507059e+37
    %v656 = vand.u32 %v641, 2147483648
    %v657 = vor.u32 1.1754944e-38, %v656
    %v658 = vsel %vm655, %v657, %v653
    %v659 = vmul.f32 %v636, %v658
    %v660 = vrcp.pop %v644
    %v661 = vmul.f32 %v644, %v660
    %v662 = vsub.f32 1.0, %v661
    %v663 = vmul.f32 %v660, %v662
    %v664 = vadd.f32 %v660, %v663
    %vm665 = vweird.f32 %v644
    %vm666 = vweird.f32 %v660
    %vm667 = vmor %vm665, %vm666
    %v668 = vsel %vm667, %v660, %v664
    %v669 = vand.u32 2147483647, %v644
    %vm670 = vcmp.eq.f32.partialorder %v669, 8.507059e+37
    %v671 = vand.u32 %v644, 2147483648
    %v672 = vor.u32 1.1754944e-38, %v671
    %v673 = vsel %vm670, %v672, %v668
    %v674 = vmul.f32 %v638, %v673
    %v675 = vpack.c.bf16 %v659, %v659
    %v676 = vpack.c.bf16 %v674, %v674
    %677 = vrot.lane.b32.xlu0 %v83, 40
    %v678 = vpop.permute.xlu0 %677
    %v680 = vsel %vm86, %v675, 0
    %v683 = vsel %vm187, %v678, 0
    %685 = vmatpush.bf16.msra.mxu0 0
    %686 = vmatpush.bf16.msra.mxu0 0
    %687 = vmatpush.bf16.msra.mxu0 0
    %688 = vmatpush.bf16.msra.mxu0 0
    %689 = vmatpush.bf16.msra.mxu0 0
    %690 = vmatpush.bf16.msra.mxu0 0
    %691 = vmatpush.bf16.msra.mxu0 0
    %692 = vmatpush.bf16.msra.mxu0 %v683
    %693 = vmatmul.bf16.gmra.mxu0 %v680
    %v694 = vpop.f32.mrf.mxu0
    %v695 = vadd.f32 0.0, %v694
    %v696 = vpop.f32.mrf.mxu0
    %697 = vdwg.mxu0
    %698 = vrot.lane.b32.xlu0 %v108, 40
    %v699 = vpop.permute.xlu0 %698
    %v701 = vsel %vm86, %v676, 0
    %v704 = vsel %vm187, %v699, 0
    %706 = vmatpush.bf16.msra.mxu0 0
    %707 = vmatpush.bf16.msra.mxu0 0
    %708 = vmatpush.bf16.msra.mxu0 0
    %709 = vmatpush.bf16.msra.mxu0 0
    %710 = vmatpush.bf16.msra.mxu0 0
    %711 = vmatpush.bf16.msra.mxu0 0
    %712 = vmatpush.bf16.msra.mxu0 0
    %713 = vmatpush.bf16.msra.mxu0 %v704
    %714 = vmatmul.bf16.gmra.mxu0 %v701
    %v715 = vpop.f32.mrf.mxu0
    %v716 = vadd.f32 0.0, %v715
    %v717 = vpop.f32.mrf.mxu0
    %718 = vdwg.mxu0
    %v719 = vpack.c.bf16 %v716, %v695
    %v720 = vpack.c.b16 %v56, %v56
    %721 = vrot.lane.b32.xlu0 %v720, 32
    %v722 = vpop.permute.xlu0 %721
    %v724 = vsel %vm86, %v719, 0
    %v727 = vsel %vm187, %v722, 0
    %729 = vmatpush.bf16.msra.mxu0 0
    %730 = vmatpush.bf16.msra.mxu0 0
    %731 = vmatpush.bf16.msra.mxu0 0
    %732 = vmatpush.bf16.msra.mxu0 0
    %733 = vmatpush.bf16.msra.mxu0 0
    %734 = vmatpush.bf16.msra.mxu0 0
    %735 = vmatpush.bf16.msra.mxu0 0
    %736 = vmatpush.bf16.msra.mxu0 %v727
    %737 = vmatmul.bf16.gmra.mxu0 %v724
    %v738 = vpop.f32.mrf.mxu0
    %v739 = vadd.f32 0.0, %v738
    %v740 = vpop.f32.mrf.mxu0
    %v741 = vadd.f32 0.0, %v740
    %742 = vdwg.mxu0
    %v743 = vadd.f32 %v577, %v739
    %v744 = vadd.f32 %v578, %v741
    %v745 = vperm.slane %v47, 0
    %v746 = vadd.f32 %v743, %v745
    %v747 = vadd.f32 %v744, %v745
    %v748 = vld [vmem:[#allocation2 + $0x2] sm:$0x1]
    %v749 = vld [vmem:[#allocation2 + $0x3] sm:$0x1]
    %v750 = vadd.f32 %v39, %v746
    %v751 = vadd.f32 %v40, %v747
    %v752 = vsel %vm61, %v750, 0.0
    %753 = vadd.xlane.f32.xlu0 %v752
    %v754 = vpop.xlane.xlu0 %753
    %v755 = vsel %vm61, %v751, 0.0
    %756 = vadd.xlane.f32.xlu0 %v755
    %v757 = vpop.xlane.xlu0 %756
    %v758 = vrcp.pop 32.0
    %v759 = vmul.f32 32.0, %v758
    %v760 = vsub.f32 1.0, %v759
    %v761 = vmul.f32 %v758, %v760
    %v762 = vadd.f32 %v758, %v761
    %vm763 = vweird.f32 %v758
    %v764 = vsel %vm763, %v758, %v762
    %v765 = vmul.f32 %v754, %v764
    %v766 = vmul.f32 %v757, %v764
    %v767 = vsub.f32 %v750, %v765
    %v768 = vsub.f32 %v751, %v766
    %v769 = vmul.f32 %v767, %v767
    %v770 = vmul.f32 %v768, %v768
    %v771 = vsel %vm61, %v769, 0.0
    %772 = vadd.xlane.f32.xlu0 %v771
    %v773 = vpop.xlane.xlu0 %772
    %v774 = vsel %vm61, %v770, 0.0
    %775 = vadd.xlane.f32.xlu0 %v774
    %v776 = vpop.xlane.xlu0 %775
    %v777 = vmul.f32 %v773, %v764
    %v778 = vmul.f32 %v776, %v764
    %v779 = vadd.f32 %v777, 1e-05
    %v780 = vadd.f32 %v778, 1e-05
    %v781 = vrsqrt.pop %v779
    %v782 = vmul.f32 %v781, %v779
    %v783 = vmul.f32 %v782, %v781
    %v784 = vmul.f32 0.5, %v783
    %v785 = vsub.f32 1.5, %v784
    %v786 = vmul.f32 %v781, %v785
    %vm787 = vweird.f32 %v779
    %vm788 = vweird.f32 %v781
    %vm789 = vmor %vm787, %vm788
    %v790 = vsel %vm789, %v781, %v786
    %v791 = vrsqrt.pop %v780
    %v792 = vmul.f32 %v791, %v780
    %v793 = vmul.f32 %v792, %v791
    %v794 = vmul.f32 0.5, %v793
    %v795 = vsub.f32 1.5, %v794
    %v796 = vmul.f32 %v791, %v795
    %vm797 = vweird.f32 %v780
    %vm798 = vweird.f32 %v791
    %vm799 = vmor %vm797, %vm798
    %v800 = vsel %vm799, %v791, %v796
    %v801 = vmul.f32 %v767, %v790
    %v802 = vmul.f32 %v768, %v800
    %v803 = vperm.slane %v748, 0
    %v804 = vmul.f32 %v801, %v803
    %v805 = vmul.f32 %v802, %v803
    %v806 = vperm.slane %v749, 0
    %v807 = vadd.f32 %v804, %v806
    %v808 = vadd.f32 %v805, %v806
    %v809 = vpack.c.bf16 %v808, %v807
    %v810 = vld [vmem:[%s4 + $0x1] sm:$0x1]
    %v811 = vld [vmem:[%s2] sm:$0xf]
    %v812 = vld [vmem:[%s2 + $0x4] sm:$0xf]
    %v813 = vld [vmem:[%s2 + $0x8] sm:$0xf]
    %v814 = vld [vmem:[%s2 + $0xc] sm:$0xf]
    %v815 = vperm.slane %v810, 0
    %v820 = vunpack.c.l.b16 %v811
    %v821 = vunpack.c.l.b16 %v812
    %v822 = vunpack.c.l.b16 %v813
    %v823 = vunpack.c.l.b16 %v814
    %v824 = vpack.c.b16 %v821, %v820
    %v825 = vpack.c.b16 %v823, %v822
    %v829 = vsel %vm61, %v809, 0
    %831 = vmatpush.bf16.msra.mxu0 0
    %832 = vmatpush.bf16.msra.mxu0 0
    %833 = vmatpush.bf16.msra.mxu0 0
    %834 = vmatpush.bf16.msra.mxu0 0
    %835 = vmatpush.bf16.msra.mxu0 0
    %836 = vmatpush.bf16.msra.mxu0 0
    %837 = vmatpush.bf16.msra.mxu0 %v825
    %838 = vmatpush.bf16.msra.mxu0 %v824
    %839 = vmatmul.bf16.gmra.mxu0 %v829
    %v840 = vpop.f32.mrf.mxu0
    %v841 = vadd.f32 %v815, %v840
    %v842 = vpop.f32.mrf.mxu0
    %v843 = vadd.f32 %v815, %v842
    %844 = vdwg.mxu0
    %v845 = vmul.f32 %v841, %v841
    %v846 = vmul.f32 %v843, %v843
    %v847 = vmul.f32 %v841, %v845
    %v848 = vmul.f32 %v843, %v846
    %v849 = vmul.f32 %v847, 0.044715
    %v850 = vmul.f32 %v848, 0.044715
    %v851 = vadd.f32 %v841, %v849
    %v852 = vadd.f32 %v843, %v850
    %v853 = vmul.f32 %v851, 0.7978846
    %v854 = vmul.f32 %v852, 0.7978846
    %v855 = vtanh.pop %v853
    %v856 = vtanh.pop %v854
    %v857 = vadd.f32 %v855, 1.0
    %v858 = vadd.f32 %v856, 1.0
    %v859 = vmul.f32 %v857, 0.5
    %v860 = vmul.f32 %v858, 0.5
    %v861 = vmul.f32 %v841, %v859
    %v862 = vmul.f32 %v843, %v860
    %v863 = vxor.u32 %v841, 2147483648
    %v864 = vxor.u32 %v843, 2147483648
    %v865 = vmul.f32 %v863, 1.442695
    %v866 = vpow.pop %v865
    %v867 = vmul.f32 %v864, 1.442695
    %v868 = vpow.pop %v867
    %v869 = vadd.f32 %v866, 1.0
    %v870 = vadd.f32 %v868, 1.0
    %v871 = vrcp.pop %v869
    %v872 = vmul.f32 %v869, %v871
    %v873 = vsub.f32 1.0, %v872
    %v874 = vmul.f32 %v871, %v873
    %v875 = vadd.f32 %v871, %v874
    %vm876 = vweird.f32 %v869
    %vm877 = vweird.f32 %v871
    %vm878 = vmor %vm876, %vm877
    %v879 = vsel %vm878, %v871, %v875
    %v880 = vand.u32 2147483647, %v869
    %vm881 = vcmp.eq.f32.partialorder %v880, 8.507059e+37
    %v882 = vand.u32 %v869, 2147483648
    %v883 = vor.u32 1.1754944e-38, %v882
    %v884 = vsel %vm881, %v883, %v879
    %v885 = vmul.f32 1.0, %v884
    %v886 = vrcp.pop %v870
    %v887 = vmul.f32 %v870, %v886
    %v888 = vsub.f32 1.0, %v887
    %v889 = vmul.f32 %v886, %v888
    %v890 = vadd.f32 %v886, %v889
    %vm891 = vweird.f32 %v870
    %vm892 = vweird.f32 %v886
    %vm893 = vmor %vm891, %vm892
    %v894 = vsel %vm893, %v886, %v890
    %v895 = vand.u32 2147483647, %v870
    %vm896 = vcmp.eq.f32.partialorder %v895, 8.507059e+37
    %v897 = vand.u32 %v870, 2147483648
    %v898 = vor.u32 1.1754944e-38, %v897
    %v899 = vsel %vm896, %v898, %v894
    %v900 = vmul.f32 1.0, %v899
    %v901 = vld [vmem:[#allocation2 + $0x1] sm:$0x1]
    %v902 = vpack.c.bf16 %v862, %v861
    %v903 = vld [vmem:[%s3] sm:$0xf]
    %v904 = vld [vmem:[%s3 + $0x4] sm:$0xf]
    %v905 = vld [vmem:[%s3 + $0x8] sm:$0xf]
    %v906 = vld [vmem:[%s3 + $0xc] sm:$0xf]
    %v907 = vld [vmem:[%s3 + $0x10] sm:$0xf]
    %v908 = vld [vmem:[%s3 + $0x14] sm:$0xf]
    %v909 = vld [vmem:[%s3 + $0x18] sm:$0xf]
    %v910 = vld [vmem:[%s3 + $0x1c] sm:$0xf]
    %v911 = vperm.slane %v901, 0
    %v920 = vunpack.c.l.b16 %v903
    %v921 = vunpack.c.l.b16 %v904
    %v922 = vunpack.c.l.b16 %v905
    %v923 = vunpack.c.l.b16 %v906
    %v924 = vunpack.c.l.b16 %v907
    %v925 = vunpack.c.l.b16 %v908
    %v926 = vunpack.c.l.b16 %v909
    %v927 = vunpack.c.l.b16 %v910
    %v928 = vpack.c.b16 %v921, %v920
    %v929 = vpack.c.b16 %v923, %v922
    %v930 = vpack.c.b16 %v925, %v924
    %v931 = vpack.c.b16 %v927, %v926
    %vm936 = vcmask 523264
    %v938 = vsel %vm936, %v902, 0
    %940 = vmatpush.bf16.msra.mxu0 0
    %941 = vmatpush.bf16.msra.mxu0 0
    %942 = vmatpush.bf16.msra.mxu0 0
    %943 = vmatpush.bf16.msra.mxu0 0
    %944 = vmatpush.bf16.msra.mxu0 %v931
    %945 = vmatpush.bf16.msra.mxu0 %v930
    %946 = vmatpush.bf16.msra.mxu0 %v929
    %947 = vmatpush.bf16.msra.mxu0 %v928
    %948 = vmatmul.bf16.gmra.mxu0 %v938
    %v949 = vpop.f32.mrf.mxu0
    %v950 = vadd.f32 %v911, %v949
    %v951 = vpop.f32.mrf.mxu0
    %v952 = vadd.f32 %v911, %v951
    %953 = vdwg.mxu0
    %956 = vrot.lane.b32.xlu0 %v950, 64
    %v957 = vpop.permute.xlu0 %956
    %958 = vrot.lane.b32.xlu0 %v952, 64
    %v959 = vpop.permute.xlu0 %958
    %v962 = vmul.f32 %v885, %v957
    %v963 = vmul.f32 %v900, %v959
    %v964 = vsub.f32 1.0, %v885
    %v965 = vsub.f32 1.0, %v900
    %968 = vrot.lane.b32.xlu0 %v807, 64
    %v969 = vpop.permute.xlu0 %968
    %970 = vrot.lane.b32.xlu0 %v808, 64
    %v971 = vpop.permute.xlu0 %970
    %v974 = vmul.f32 %v964, %v969
    %v975 = vmul.f32 %v965, %v971
    %v976 = vadd.f32 %v962, %v974
    %v977 = vadd.f32 %v963, %v975
    %v978 = vld [vmem:[#allocation2 + $0x4] sm:$0x1]
    %v979 = vld [vmem:[#allocation2 + $0x5] sm:$0x1]
    %982 = vrot.lane.b32.xlu0 %v976, 64
    %v983 = vpop.permute.xlu0 %982
    %984 = vrot.lane.b32.xlu0 %v977, 64
    %v985 = vpop.permute.xlu0 %984
    %v988 = vadd.f32 %v807, %v983
    %v989 = vadd.f32 %v808, %v985
    %v990 = vsel %vm61, %v988, 0.0
    %991 = vadd.xlane.f32.xlu0 %v990
    %v992 = vpop.xlane.xlu0 %991
    %v993 = vsel %vm61, %v989, 0.0
    %994 = vadd.xlane.f32.xlu0 %v993
    %v995 = vpop.xlane.xlu0 %994
    %v996 = vmul.f32 %v992, %v764
    %v997 = vmul.f32 %v995, %v764
    %v998 = vsub.f32 %v988, %v996
    %v999 = vsub.f32 %v989, %v997
    %v1000 = vmul.f32 %v998, %v998
    %v1001 = vmul.f32 %v999, %v999
    %v1002 = vsel %vm61, %v1000, 0.0
    %1003 = vadd.xlane.f32.xlu0 %v1002
    %v1004 = vpop.xlane.xlu0 %1003
    %v1005 = vsel %vm61, %v1001, 0.0
    %1006 = vadd.xlane.f32.xlu0 %v1005
    %v1007 = vpop.xlane.xlu0 %1006
    %v1008 = vmul.f32 %v1004, %v764
    %v1009 = vmul.f32 %v1007, %v764
    %v1010 = vadd.f32 %v1008, 1e-05
    %v1011 = vadd.f32 %v1009, 1e-05
    %v1012 = vrsqrt.pop %v1010
    %v1013 = vmul.f32 %v1012, %v1010
    %v1014 = vmul.f32 %v1013, %v1012
    %v1015 = vmul.f32 0.5, %v1014
    %v1016 = vsub.f32 1.5, %v1015
    %v1017 = vmul.f32 %v1012, %v1016
    %vm1018 = vweird.f32 %v1010
    %vm1019 = vweird.f32 %v1012
    %vm1020 = vmor %vm1018, %vm1019
    %v1021 = vsel %vm1020, %v1012, %v1017
    %v1022 = vrsqrt.pop %v1011
    %v1023 = vmul.f32 %v1022, %v1011
    %v1024 = vmul.f32 %v1023, %v1022
    %v1025 = vmul.f32 0.5, %v1024
    %v1026 = vsub.f32 1.5, %v1025
    %v1027 = vmul.f32 %v1022, %v1026
    %vm1028 = vweird.f32 %v1011
    %vm1029 = vweird.f32 %v1022
    %vm1030 = vmor %vm1028, %vm1029
    %v1031 = vsel %vm1030, %v1022, %v1027
    %v1032 = vmul.f32 %v998, %v1021
    %v1033 = vmul.f32 %v999, %v1031
    %v1034 = vperm.slane %v978, 0
    %v1035 = vmul.f32 %v1032, %v1034
    %v1036 = vmul.f32 %v1033, %v1034
    %v1037 = vperm.slane %v979, 0
    %v1038 = vadd.f32 %v1035, %v1037
    %v1039 = vadd.f32 %v1036, %v1037
    %1040 = vst.msk [vmem:[#allocation5] sm:$0xff] %vm61, %v1038
    %1041 = vst.msk [vmem:[#allocation5 + $0x8] sm:$0xff] %vm61, %v1039
    // Predicated region
    $region30: #{encoder_layer.1} parent=1 // pred_check
      _
    $region31: #{encoder_layer.1} parent=1 // pred_check_branch
      %1043 = sbr.rel (0) target = $region33
    $region32: #{encoder_layer.1} parent=1 // pred_region
      %1045 = vsyncadd [#allocation4], 0
      %s1046 = sshll.u32 [#allocation5], 4
      %s1047 = int_to_ptr.vmem [resolvable:$true] %s1046
      %s1048 = sshll.u32 %s6, 4
      %s1049 = int_to_ptr.hbm [resolvable:$true] %s1048
      %1054 = dma.vmem_to_hbm [thread:$0]  %s1047, 256, %s1049, [#allocation4], 128, 128, 8
    $region33: #{encoder_layer.1} parent=1 // pred_fallthru
      _
    // Predicated region
    $region34: #{encoder_layer.1} parent=1 // pred_check
      _
    $region35: #{encoder_layer.1} parent=1 // pred_check_branch
      %1056 = sbr.rel (0) target = $region37
    $region36: #{encoder_layer.1} parent=1 // pred_region
      %1058 = dma.done [#allocation4], 256
    $region37: #{encoder_layer.1} parent=1 // pred_fallthru
      _
    %1059 = vsyncpa [#allocation3], 1
    %1060 = vsyncpa [#allocation4], 1

</llo_original>
